<compile_context>
chip_gen: v7x
topology: tpu7x:2x2x1
jax: 0.10.0
libtpu: 0.0.40
codegen_flags: <defaults>
</compile_context>

<pallas_src>
import jax
import jax.numpy as jnp
from jax.experimental import pallas as pl
from jax.experimental.pallas import tpu as pltpu


def _round_up(a, m):
    return ((a + m - 1) // m) * m


def _pick_batch_tile(B, max_tile):
    """Choose (tile_batch, padded_batch) avoiding host-side pad/slice when possible."""
    # Single tile covering the whole batch: block == full array dim, so the
    # (8,128) divisibility rule does not apply and no pad / trailing slice is needed.
    if B <= max_tile:
        return B, B
    # Multi-tile: prefer a tile that is a multiple of 16 (bf16 sublane packing,
    # also satisfies f32's 8) and divides B exactly -> no pad, no out[:B] slice.
    start = max(16, max_tile - (max_tile % 16))
    for tb in range(start, 0, -16):
        if B % tb == 0:
            return tb, B
    # Fallback (rare): pad the batch up to a tile multiple.
    return start, _round_up(B, start)


def mlp_kernel(x_ref, w_ref, b_ref, o_ref):
    # x_ref: (TB, F_in) f32, w_ref: (F_in, F_out) bf16,
    # b_ref: (1, F_out) f32,  o_ref: (TB, F_out) bf16
    x_bf = x_ref[...].astype(jnp.bfloat16)            # in-kernel cast (fused, free-ish)
    h = jnp.dot(x_bf, w_ref[...], preferred_element_type=jnp.float32)
    h = h + b_ref[...]                                # bias broadcast over batch (f32)
    h = jnp.tanh(h)                                   # Tanh activation (f32, EUP)
    # Softmax over dim=1.  tanh bounds h to [-1, 1] -> exp cannot overflow,
    # so the usual max-subtraction is dead work and is skipped.
    e = jnp.exp(h)
    denom = jnp.sum(e, axis=-1, keepdims=True)
    # Exact divide: row sums stay 1.0 to f32 precision before the bf16 cast.
    o_ref[...] = (e / denom).astype(o_ref.dtype)


def simple_mlp_forward(x, w, b, *, max_batch_tile=8192, out_dtype=jnp.bfloat16):
    """x: (B, F_in) f32, w: (F_in, F_out), b: (1, F_out) -> (B, F_out) out_dtype."""
    B, F_in = x.shape
    F_out = w.shape[1]

    x_f32 = x.astype(jnp.float32)                 # no wrapper-side bf16 pass over x
    w_bf = w.astype(jnp.bfloat16)                 # tiny, VMEM-resident across the grid
    b_f32 = b.astype(jnp.float32).reshape(1, F_out)

    tb, b_pad = _pick_batch_tile(B, max_batch_tile)
    if b_pad != B:
        x_f32 = jnp.pad(x_f32, ((0, b_pad - B), (0, 0)))

    out = pl.pallas_call(
        mlp_kernel,
        out_shape=jax.ShapeDtypeStruct((b_pad, F_out), out_dtype),
        grid=(b_pad // tb,),
        in_specs=[
            pl.BlockSpec((tb, F_in), lambda i: (i, 0)),      # x: batch-tiled
            pl.BlockSpec((F_in, F_out), lambda i: (0, 0)),   # w: VMEM-resident
            pl.BlockSpec((1, F_out), lambda i: (0, 0)),      # b: VMEM-resident
        ],
        out_specs=pl.BlockSpec((tb, F_out), lambda i: (i, 0)),  # lane-dense 128-wide
        compiler_params=pltpu.CompilerParams(
            # NOTE: on v7x verify in xprof that both TensorCores run this axis;
            # if not, switch to pltpu.CORE_PARALLEL / an explicit core split.
            dimension_semantics=("parallel",),
            vmem_limit_bytes=48 * 1024 * 1024,
        ),
    )(x_f32, w_bf, b_f32)

    if b_pad != B:
        out = out[:B]
    return out


def init_params(key, input_features=10, layer_dims=(128,)):
    # Deterministic init mimicking nn.Linear default (uniform in +/- 1/sqrt(fan_in)).
    (hidden,) = layer_dims
    k_w, k_b = jax.random.split(key)
    bound = 1.0 / jnp.sqrt(jnp.float32(input_features))
    # stored as (in_features, out_features) = transpose of torch's (out, in)
    w = jax.random.uniform(k_w, (input_features, hidden), jnp.float32, -bound, bound)
    b = jax.random.uniform(k_b, (1, hidden), jnp.float32, -bound, bound)
    return w, b


def _reference(x, w, b):
    # Same bf16-weight/activation-input path as the kernel, f32 math, exact softmax.
    xb = x.astype(jnp.bfloat16).astype(jnp.float32)
    wb = w.astype(jnp.bfloat16).astype(jnp.float32)
    return jax.nn.softmax(jnp.tanh(xb @ wb + b.reshape(1, -1)), axis=1)


def _check(out, ref, B, F_hidden):
    assert out.shape == (B, F_hidden)
    out32 = out.astype(jnp.float32)
    assert jnp.allclose(out32, ref, atol=5e-3, rtol=5e-3)
    assert jnp.allclose(jnp.sum(out32, axis=1), 1.0, atol=5e-3)


if __name__ == "__main__":
    key = jax.random.PRNGKey(0)
    k_x, k_p, k_x2, k_x3 = jax.random.split(key, 4)

    B, F_in, F_hidden = 8, 10, 128
    x = jax.random.normal(k_x, (B, F_in), jnp.float32)
    w, b = init_params(k_p, input_features=F_in, layer_dims=(F_hidden,))

    # Single-tile path (no pad, no slice).
    out = simple_mlp_forward(x, w, b)
    jax.block_until_ready(out)
    assert out.dtype == jnp.bfloat16
    _check(out, _reference(x, w, b), B, F_hidden)

    # Multi-tile grid path where the tile divides the batch (no pad / no slice).
    B2 = 96
    x2 = jax.random.normal(k_x2, (B2, F_in), jnp.float32)
    out2 = simple_mlp_forward(x2, w, b, max_batch_tile=32)
    jax.block_until_ready(out2)
    _check(out2, _reference(x2, w, b), B2, F_hidden)

    # Ragged fallback path (pad + slice) stays correct.
    B3 = 100
    x3 = jax.random.normal(k_x3, (B3, F_in), jnp.float32)
    out3 = simple_mlp_forward(x3, w, b, max_batch_tile=32)
    jax.block_until_ready(out3)
    _check(out3, _reference(x3, w, b), B3, F_hidden)

    print("KERNEL_OK")
</pallas_src>

<mosaic_0001>
module attributes {stable_mosaic.version = 11 : i64} {
  func.func @mlp_kernel(%arg0: i32, %arg1: memref<8x10xf32, #tpu.memory_space<vmem>>, %arg2: memref<10x128xbf16, #tpu.memory_space<vmem>>, %arg3: memref<1x128xf32, #tpu.memory_space<vmem>>, %arg4: memref<8x128xbf16, #tpu.memory_space<vmem>>) attributes {dimension_semantics = [#tpu.dimension_semantics<parallel>], iteration_bounds = array<i64: 1>, scalar_prefetch = 0 : i64, scratch_operands = 0 : i64, tpu.core_type = #tpu.core_type<tc>, window_params = [{transform_indices = @transform_0, window_bounds = array<i64: 8, 10>}, {pipeline_mode = #tpu.pipeline_mode<synchronous>, transform_indices = @transform_1, window_bounds = array<i64: 10, 128>}, {pipeline_mode = #tpu.pipeline_mode<synchronous>, transform_indices = @transform_2, window_bounds = array<i64: 1, 128>}, {transform_indices = @transform_3, window_bounds = array<i64: 8, 128>}]} {
    %c0 = arith.constant 0 : index
    %c0_0 = arith.constant 0 : index
    %0 = vector.load %arg1[%c0, %c0_0] : memref<8x10xf32, #tpu.memory_space<vmem>>, vector<8x10xf32>
    %1 = arith.truncf %0 : vector<8x10xf32> to vector<8x10xbf16>
    %c0_1 = arith.constant 0 : index
    %c0_2 = arith.constant 0 : index
    %2 = vector.load %arg2[%c0_1, %c0_2] : memref<10x128xbf16, #tpu.memory_space<vmem>>, vector<10x128xbf16>
    %cst = arith.constant dense<0.000000e+00> : vector<8x128xf32>
    %3 = tpu.matmul %1, %2, %cst {dimension_numbers = #tpu.dot_dimension_numbers<[1], [0], [0], [1], [0, 0, 1, 1], [], []>} : vector<8x10xbf16>, vector<10x128xbf16>, vector<8x128xf32> -> vector<8x128xf32>
    %c0_3 = arith.constant 0 : index
    %c0_4 = arith.constant 0 : index
    %4 = vector.load %arg3[%c0_3, %c0_4] : memref<1x128xf32, #tpu.memory_space<vmem>>, vector<1x128xf32>
    %5 = vector.broadcast %4 : vector<1x128xf32> to vector<8x128xf32>
    %6 = arith.addf %3, %5 : vector<8x128xf32>
    %7 = math.tanh %6 : vector<8x128xf32>
    %8 = math.exp %7 : vector<8x128xf32>
    %cst_5 = arith.constant dense<0.000000e+00> : vector<8xf32>
    %9 = vector.multi_reduction <add>, %8, %cst_5 [1] : vector<8x128xf32> to vector<8xf32>
    %10 = vector.shape_cast %9 : vector<8xf32> to vector<8x1xf32>
    %11 = vector.broadcast %10 : vector<8x1xf32> to vector<8x128xf32>
    %12 = arith.divf %8, %11 : vector<8x128xf32>
    %13 = arith.truncf %12 : vector<8x128xf32> to vector<8x128xbf16>
    %c0_6 = arith.constant 0 : index
    %c0_7 = arith.constant 0 : index
    %14 = vector.load %arg4[%c0_6, %c0_7] : memref<8x128xbf16, #tpu.memory_space<vmem>>, vector<8x128xbf16>
    tpu.vector_store %arg4[%c0_6, %c0_7], %13 {strides = array<i32>} : memref<8x128xbf16, #tpu.memory_space<vmem>>, vector<8x128xbf16>,
    return
  }
  func.func @transform_0(%arg0: i32) -> (i32, i32) {
    %c0_i32 = arith.constant 0 : i32
    %c0_i32_0 = arith.constant 0 : i32
    return %arg0, %c0_i32 : i32, i32
  }
  func.func @transform_1(%arg0: i32) -> (i32, i32) {
    %c0_i32 = arith.constant 0 : i32
    %c0_i32_0 = arith.constant 0 : i32
    %c0_i32_1 = arith.constant 0 : i32
    return %c0_i32, %c0_i32_0 : i32, i32
  }
  func.func @transform_2(%arg0: i32) -> (i32, i32) {
    %c0_i32 = arith.constant 0 : i32
    %c0_i32_0 = arith.constant 0 : i32
    %c0_i32_1 = arith.constant 0 : i32
    return %c0_i32, %c0_i32_0 : i32, i32
  }
  func.func @transform_3(%arg0: i32) -> (i32, i32) {
    %c0_i32 = arith.constant 0 : i32
    %c0_i32_0 = arith.constant 0 : i32
    return %arg0, %c0_i32 : i32, i32
  }
}

</mosaic_0001>

<llo_original>
// kernel: tpu_custom_call.1
$region0: #{tpu_custom_call.1}
  #allocation0 [shape = 'u32[]', space=smem, size = 0x4, offset = 0x4, fixed_abs, tag = 'smem constant byte address 0x4 - core index']
  #allocation1 [shape = 'u32[144,128]{1,0:T(1,128)}', space=vmem, size = 0x12000, scoped, tag = 'internal scratch']
  %s0 = inlined_call_operand.hbm [shape: f32[8,10], index: 0, kind: input, shape index: {}]
  %s1 = inlined_call_operand.hbm [shape: bf16[10,128], index: 1, kind: input, shape index: {}]
  %s2 = inlined_call_operand.vmem [shape: f32[1,128], index: 2, kind: input, shape index: {}]
  %s3 = inlined_call_operand.hbm [shape: bf16[8,128], index: 3, kind: output, shape index: {}]
  %s4 = sld [smem:[#allocation0]]
  $region30: #{tpu_custom_call.1} parent=0
    _
  %s6 = ssub.s32 1, %s4
  %s7 = scalar_select 0, %s6, %s4
  $region1: #{tpu_custom_call.1} parent=0
    #allocation2 [shape = 'u8[4096]{0}', space=vmem, size = 0x1000, scoped, tag = 'input window, operand 0, single buffered']
    #allocation3 [shape = 's32[1]{0}', space=sflag, size = 0x4, scoped, tag = 'scoped memory for tpu_custom_call.1']
    #allocation4 [shape = 's32[1]{0}', space=sflag, size = 0x4, scoped, tag = 'scoped memory for tpu_custom_call.1']
    #allocation5 [shape = 'u8[4096]{0}', space=vmem, size = 0x1000, scoped, tag = 'input window, operand 1, single buffered']
    #allocation6 [shape = 's32[1]{0}', space=sflag, size = 0x4, scoped, tag = 'scoped memory for tpu_custom_call.1']
    #allocation7 [shape = 'u8[2048]{0}', space=vmem, size = 0x800, scoped, tag = 'output window, operand 0, single buffered']
    %8 = vsyncpa [#allocation3], 0
    %9 = vsyncpa [#allocation6], 0
    %10 = vsyncpa [#allocation4], 0
    // Predicated region
    $region2: #{tpu_custom_call.1} parent=1 // pred_check
      _
    $region3: #{tpu_custom_call.1} parent=1 // pred_check_branch
      %12 = sbr.rel (0) target = $region5
    $region4: #{tpu_custom_call.1} parent=1 // pred_region
      %s14 = ssub.s32 128, 128
      %15 = vsyncadd [#allocation3], %s14
      %s17 = sshll.u32 [#allocation2], 4
      %s18 = int_to_ptr.vmem [resolvable:$true] %s17
      %20 = dma.hbm_to_vmem [thread:$0]  %s0, 128, %s18, [#allocation3]
    $region5: #{tpu_custom_call.1} parent=1 // pred_fallthru
      _
    // Predicated region
    $region6: #{tpu_custom_call.1} parent=1 // pred_check
      _
    $region7: #{tpu_custom_call.1} parent=1 // pred_check_branch
      %22 = sbr.rel (0) target = $region9
    $region8: #{tpu_custom_call.1} parent=1 // pred_region
      %s24 = ssub.s32 128, 128
      %25 = vsyncadd [#allocation6], %s24
      %s26 = sshll.u32 [#allocation5], 4
      %s27 = int_to_ptr.vmem [resolvable:$true] %s26
      %32 = dma.hbm_to_vmem [thread:$0]  %s1, 128, %s27, [#allocation6], 64, 64, 4
    $region9: #{tpu_custom_call.1} parent=1 // pred_fallthru
      _
    // Predicated region
    $region10: #{tpu_custom_call.1} parent=1 // pred_check
      _
    $region11: #{tpu_custom_call.1} parent=1 // pred_check_branch
      %34 = sbr.rel (0) target = $region13
    $region12: #{tpu_custom_call.1} parent=1 // pred_region
      _
    $region13: #{tpu_custom_call.1} parent=1 // pred_fallthru
      _
    // Predicated region
    $region14: #{tpu_custom_call.1} parent=1 // pred_check
      _
    $region15: #{tpu_custom_call.1} parent=1 // pred_check_branch
      %36 = sbr.rel (0) target = $region17
    $region16: #{tpu_custom_call.1} parent=1 // pred_region
      %37 = dma.done [#allocation3], 128
    $region17: #{tpu_custom_call.1} parent=1 // pred_fallthru
      _
    // Predicated region
    $region18: #{tpu_custom_call.1} parent=1 // pred_check
      _
    $region19: #{tpu_custom_call.1} parent=1 // pred_check_branch
      %39 = sbr.rel (0) target = $region21
    $region20: #{tpu_custom_call.1} parent=1 // pred_region
      %40 = dma.done [#allocation6], 128
    $region21: #{tpu_custom_call.1} parent=1 // pred_fallthru
      _
    %v42 = vld [vmem:[#allocation2] sm:$0xff]
    %v43 = vpack.c.bf16 %v42, %v42
    %v44 = vld [vmem:[#allocation5] sm:$0xf]
    %v45 = vld [vmem:[#allocation5 + $0x4] sm:$0x1]
    %v46 = vld [vmem:[%s2] sm:$0x1]
    %v48 = vlaneseq
    %v49 = vshrl.u32 %v48, 7
    %v50 = vsub.s32 0, %v49
    %v51 = vrot.slane %v46, %v50
    %v55 = vunpack.c.l.b16 %v44
    %v56 = vunpack.c.l.b16 %v45
    %v57 = vpack.c.b16 %v56, %v55
    %vm58 = vcmask 80896
    %v60 = vsel %vm58, %v43, 0
    %vm62 = vcmask 1044480
    %v64 = vsel %vm62, %v57, 0
    %66 = vmatprep.subr.bf16.mxu0 0
    %67 = vmatpush1.bf16.msra.mxu0 %v64
    %68 = vmatprep.subr.bf16.mxu0 0
    %69 = vmatpush1.bf16.msra.mxu0 0
    %70 = vmatprep.subr.bf16.mxu0 0
    %71 = vmatpush1.bf16.msra.mxu0 0
    %72 = vmatprep.subr.bf16.mxu0 0
    %73 = vmatpush1.bf16.msra.mxu0 0
    %74 = vmatprep.subr.bf16.mxu0 0
    %75 = vmatpush1.bf16.msra.mxu0 0
    %76 = vmatprep.subr.bf16.mxu0 0
    %77 = vmatpush1.bf16.msra.mxu0 0
    %78 = vmatprep.subr.bf16.mxu0 0
    %79 = vmatpush1.bf16.msra.mxu0 0
    %80 = vmatprep.subr.bf16.mxu0 0
    %81 = vmatpush1.bf16.msra.mxu0 0
    %82 = vmatprep.subr.bf16.mxu0 0
    %83 = vmatpush1.bf16.msra.mxu0 0
    %84 = vmatprep.subr.bf16.mxu0 0
    %85 = vmatpush1.bf16.msra.mxu0 0
    %86 = vmatprep.subr.bf16.mxu0 0
    %87 = vmatpush1.bf16.msra.mxu0 0
    %88 = vmatprep.subr.bf16.mxu0 0
    %89 = vmatpush1.bf16.msra.mxu0 0
    %90 = vmatprep.subr.bf16.mxu0 0
    %91 = vmatpush1.bf16.msra.mxu0 0
    %92 = vmatprep.subr.bf16.mxu0 0
    %93 = vmatpush1.bf16.msra.mxu0 0
    %94 = vmatprep.subr.bf16.mxu0 0
    %95 = vmatpush1.bf16.msra.mxu0 0
    %96 = vmatprep.subr.bf16.mxu0 0
    %97 = vmatpush1.bf16.msra.mxu0 0
    %98 = vmatprep.mubr.bf16.mxu0 0
    %99 = vmatmul.mubr.bf16.gmra.mrb[0].mxu0 %v60
    %v100 = vpop.f32.mrb[0].mxu0
    %v101 = vadd.f32 %v51, %v100
    %v102 = vpop.f32.mrb[0].mxu0
    %v103 = vpop.f32.mrb[0].mxu0
    %v104 = vpop.f32.mrb[0].mxu0
    %105 = vdwg.mxu0
    %v106 = vtanh.pop %v101
    %v107 = vmul.f32 %v106, 1.442695
    %v108 = vpow.pop %v107
    %109 = vadd.xlane.f32.xlu0 %v108
    %v110 = vpop.xlane.xlu0 %109
    %v111 = vrcp.pop %v110
    %v112 = vmul.f32 %v108, %v111
    %v113 = vpack.c.bf16 %v112, %v112
    %114 = vst [vmem:[#allocation7] sm:$0xf] %v113
    // Predicated region
    $region22: #{tpu_custom_call.1} parent=1 // pred_check
      _
    $region23: #{tpu_custom_call.1} parent=1 // pred_check_branch
      %116 = sbr.rel (0) target = $region25
    $region24: #{tpu_custom_call.1} parent=1 // pred_region
      %s118 = ssub.s32 64, 64
      %119 = vsyncadd [#allocation4], %s118
      %s121 = sshll.u32 [#allocation7], 4
      %s122 = int_to_ptr.vmem [resolvable:$true] %s121
      %124 = dma.vmem_to_hbm [thread:$0]  %s122, 64, %s3, [#allocation4]
    $region25: #{tpu_custom_call.1} parent=1 // pred_fallthru
      _
    // Predicated region
    $region26: #{tpu_custom_call.1} parent=1 // pred_check
      _
    $region27: #{tpu_custom_call.1} parent=1 // pred_check_branch
      %126 = sbr.rel (0) target = $region29
    $region28: #{tpu_custom_call.1} parent=1 // pred_region
      %127 = dma.done [#allocation4], 64
    $region29: #{tpu_custom_call.1} parent=1 // pred_fallthru
      _
    %128 = vsyncpa [#allocation3], 1
    %129 = vsyncpa [#allocation6], 1
    %130 = vsyncpa [#allocation4], 1

</llo_original>
